<compile_context>
chip_gen: v7x
topology: tpu7x:2x2x1
jax: 0.10.0
libtpu: 0.0.40
codegen_flags: <defaults>
</compile_context>

<pallas_src>
from math import sqrt

import jax
import jax.numpy as jnp
from jax.experimental import pallas as pl
from jax.experimental.pallas import tpu as pltpu


def make_mhsa_kernel(*, block_b, len_q, len_kv, dim_z, dim_qk, dim_v,
                     inv_scale, compute_dtype, shared_qkv):
    approx_recip = (compute_dtype == jnp.bfloat16)

    def attention_tail(q, k, v, wo_h, out_ref, acc_ref):
        # q: (bt*Lq, dqk) f32, k: (bt*Lkv, dqk) f32, v: (bt*Lkv, dv) f32
        # wo_h: (dv, dim_z) in compute_dtype
        q3 = (q * inv_scale).reshape(block_b, len_q, dim_qk).astype(compute_dtype)
        k3 = k.reshape(block_b, len_kv, dim_qk).astype(compute_dtype)
        v3 = v.reshape(block_b, len_kv, dim_v).astype(compute_dtype)

        # scores: contract over d directly (no explicit kh.T), batched over bt
        s = jnp.einsum("bqd,bkd->bqk", q3, k3,
                       preferred_element_type=jnp.float32)        # (bt, Lq, Lkv)
        # TODO(synk): optional key `mask` (masked_fill with -inf) not implemented.

        # numerically-stable softmax over keys; divide -> reciprocal multiply
        m = jnp.max(s, axis=-1, keepdims=True)
        e = jnp.exp(s - m)
        denom = jnp.sum(e, axis=-1, keepdims=True)
        p = e * pl.reciprocal(denom, approx=approx_recip)

        o = jnp.einsum("bqk,bkd->bqd", p.astype(compute_dtype), v3,
                       preferred_element_type=jnp.float32)        # (bt, Lq, dv)

        y = jnp.dot(o.reshape(block_b * len_q, dim_v).astype(compute_dtype), wo_h,
                    preferred_element_type=jnp.float32)           # (bt*Lq, dim_z)
        acc_ref[...] += y.reshape(block_b, len_q, dim_z)

        @pl.when(pl.program_id(1) == pl.num_programs(1) - 1)
        def _():
            out_ref[...] = acc_ref[...].astype(out_ref.dtype)

    if shared_qkv:
        def kernel(x_ref, wq_ref, wo_ref, out_ref, acc_ref):
            @pl.when(pl.program_id(1) == 0)
            def _():
                acc_ref[...] = jnp.zeros_like(acc_ref)

            wq_h = wq_ref[0]                                       # (dim_z, dqk)
            x = x_ref[...].reshape(block_b * len_q, dim_z)
            # query_linear reused for q, k and v; identical inputs -> project once
            proj = jnp.dot(x, wq_h, preferred_element_type=jnp.float32)
            attention_tail(proj, proj, proj, wo_ref[0], out_ref, acc_ref)
        return kernel

    def kernel(q_ref, k_ref, v_ref, wq_ref, wo_ref, out_ref, acc_ref):
        @pl.when(pl.program_id(1) == 0)
        def _():
            acc_ref[...] = jnp.zeros_like(acc_ref)

        wq_h = wq_ref[0]                                           # (dim_z, dqk)
        qx = q_ref[...].reshape(block_b * len_q, dim_z)
        kx = k_ref[...].reshape(block_b * len_kv, dim_z)
        vx = v_ref[...].reshape(block_b * len_kv, dim_z)

        # NOTE: the reference module applies query_linear to q, k AND v.
        q = jnp.dot(qx, wq_h, preferred_element_type=jnp.float32)
        k = jnp.dot(kx, wq_h, preferred_element_type=jnp.float32)
        v = jnp.dot(vx, wq_h, preferred_element_type=jnp.float32)
        attention_tail(q, k, v, wo_ref[0], out_ref, acc_ref)

    return kernel


def multi_head_self_attention(inputs_query, inputs_key, inputs_value, wq, wo, *,
                              heads, dim_qk, dim_v, block_b=8,
                              compute_dtype=None,
                              vmem_limit_bytes=32 * 1024 * 1024):
    """wq: (dim_qk*heads, dim_z) and wo: (dim_z, dim_v*heads) in PyTorch
    nn.Linear convention (out, in)."""
    B, len_q, dim_z = inputs_query.shape
    _, len_k, _ = inputs_key.shape
    _, len_v, _ = inputs_value.shape

    # query_linear is reused for value -> the reference .view() only works
    # when dim_v == dim_qk; make the requirement explicit.
    assert dim_v == dim_qk, "reference module requires dim_v == dim_qk"
    assert len_k == len_v, "key/value sequence lengths must match"
    assert wq.shape == (heads * dim_qk, dim_z)
    assert wo.shape == (dim_z, heads * dim_v)

    out_dtype = inputs_query.dtype
    if compute_dtype is None:
        compute_dtype = inputs_query.dtype

    shared_qkv = (inputs_key is inputs_query) and (inputs_value is inputs_query)

    # biggest batch block <= block_b that divides B (fold batch into MXU M-dim)
    bt = max(1, min(block_b, B))
    while B % bt:
        bt -= 1

    inv_scale = 1.0 / sqrt(dim_qk)

    # Per-head weight slabs, pre-transposed for plain `x @ W`.
    # TODO(synk): hoist these one-time reshapes/casts out of the hot path in a
    # real deployment (they are cheap, constant-foldable under jit).
    wq_heads = wq.reshape(heads, dim_qk, dim_z).transpose(0, 2, 1).astype(compute_dtype)
    wo_heads = wo.T.reshape(heads, dim_v, dim_z).astype(compute_dtype)

    kernel = make_mhsa_kernel(
        block_b=bt, len_q=len_q, len_kv=len_k, dim_z=dim_z, dim_qk=dim_qk,
        dim_v=dim_v, inv_scale=inv_scale, compute_dtype=compute_dtype,
        shared_qkv=shared_qkv)

    act_spec = pl.BlockSpec((bt, len_q, dim_z), lambda b, h: (b, 0, 0))
    kv_spec = pl.BlockSpec((bt, len_k, dim_z), lambda b, h: (b, 0, 0))
    wq_spec = pl.BlockSpec((1, dim_z, dim_qk), lambda b, h: (h, 0, 0))
    wo_spec = pl.BlockSpec((1, dim_v, dim_z), lambda b, h: (h, 0, 0))

    if shared_qkv:
        in_specs = [act_spec, wq_spec, wo_spec]
        operands = (inputs_query.astype(compute_dtype), wq_heads, wo_heads)
    else:
        in_specs = [act_spec, kv_spec, kv_spec, wq_spec, wo_spec]
        operands = (inputs_query.astype(compute_dtype),
                    inputs_key.astype(compute_dtype),
                    inputs_value.astype(compute_dtype),
                    wq_heads, wo_heads)

    return pl.pallas_call(
        kernel,
        out_shape=jax.ShapeDtypeStruct((B, len_q, dim_z), out_dtype),
        grid_spec=pltpu.PrefetchScalarGridSpec(
            num_scalar_prefetch=0,
            grid=(B // bt, heads),          # head axis = reduction, kept last
            in_specs=in_specs,
            out_specs=pl.BlockSpec((bt, len_q, dim_z), lambda b, h: (b, 0, 0)),
            scratch_shapes=[pltpu.VMEM((bt, len_q, dim_z), jnp.float32)]),
        compiler_params=pltpu.CompilerParams(
            dimension_semantics=("parallel", "arbitrary"),
            vmem_limit_bytes=vmem_limit_bytes),
    )(*operands)


def reference_jax(inputs_query, inputs_key, inputs_value, wq, wo,
                  *, heads, dim_qk, dim_v):
    """Plain-JAX transcription of the PyTorch forward (for validation)."""
    B, Lq, _ = inputs_query.shape
    Lk = inputs_key.shape[1]
    Lv = inputs_value.shape[1]
    scale = sqrt(dim_qk)

    def proj(x, L, d):
        y = x @ wq.T                                   # (B, L, H*dqk)
        return y.reshape(B, L, heads, d).transpose(0, 2, 1, 3)

    q = proj(inputs_query, Lq, dim_qk)
    k = proj(inputs_key, Lk, dim_qk)
    v = proj(inputs_value, Lv, dim_v)

    alpha = jnp.einsum("bhqd,bhkd->bhqk", q, k) / scale
    alpha = jax.nn.softmax(alpha, axis=-1)
    x = jnp.einsum("bhqk,bhkd->bhqd", alpha, v)
    x = x.transpose(0, 2, 1, 3).reshape(B, Lq, heads * dim_v)
    return x @ wo.T


if __name__ == "__main__":
    # small shapes consistent with the module
    B, L = 2, 8
    dim_z = 32
    dim_qk = 16
    dim_v = 16         # must equal dim_qk (query_linear reused for value)
    heads = 2
    # dropout = 0.0 -> no dropout attribute, identity in forward

    key = jax.random.PRNGKey(0)
    k1, k2, k3, k4, k5 = jax.random.split(key, 5)

    inputs_query = jax.random.normal(k1, (B, L, dim_z), dtype=jnp.float32)
    inputs_key = jax.random.normal(k2, (B, L, dim_z), dtype=jnp.float32)
    inputs_value = jax.random.normal(k3, (B, L, dim_z), dtype=jnp.float32)

    # deterministic parameter init (PyTorch nn.Linear weight layout: (out, in))
    wq = jax.random.normal(k4, (dim_qk * heads, dim_z), dtype=jnp.float32) * 0.1
    wo = jax.random.normal(k5, (dim_z, dim_v * heads), dtype=jnp.float32) * 0.1

    # 1) general (distinct q/k/v inputs) path, f32
    out = multi_head_self_attention(
        inputs_query, inputs_key, inputs_value, wq, wo,
        heads=heads, dim_qk=dim_qk, dim_v=dim_v)
    out = jax.block_until_ready(out)
    ref = reference_jax(inputs_query, inputs_key, inputs_value, wq, wo,
                        heads=heads, dim_qk=dim_qk, dim_v=dim_v)
    assert out.shape == (B, L, dim_z)
    assert jnp.allclose(out, ref, atol=1e-4, rtol=1e-4)

    # 2) true self-attention (same tensor for q/k/v): deduped DMA + single projection
    out_self = multi_head_self_attention(
        inputs_query, inputs_query, inputs_query, wq, wo,
        heads=heads, dim_qk=dim_qk, dim_v=dim_v)
    out_self = jax.block_until_ready(out_self)
    ref_self = reference_jax(inputs_query, inputs_query, inputs_query, wq, wo,
                             heads=heads, dim_qk=dim_qk, dim_v=dim_v)
    assert jnp.allclose(out_self, ref_self, atol=1e-4, rtol=1e-4)

    # 3) bf16 MXU-operand mode (f32 accumulation + f32 softmax math)
    out_bf16 = multi_head_self_attention(
        inputs_query, inputs_key, inputs_value, wq, wo,
        heads=heads, dim_qk=dim_qk, dim_v=dim_v, compute_dtype=jnp.bfloat16)
    out_bf16 = jax.block_until_ready(out_bf16)
    assert out_bf16.dtype == jnp.float32
    assert jnp.allclose(out_bf16, ref, atol=3e-2, rtol=3e-2)

    print("KERNEL_OK")
</pallas_src>

<mosaic_0001>
module attributes {stable_mosaic.version = 11 : i64} {
  func.func @kernel(%arg0: i32, %arg1: i32, %arg2: memref<2x8x32xf32, #tpu.memory_space<vmem>>, %arg3: memref<2x8x32xf32, #tpu.memory_space<vmem>>, %arg4: memref<2x8x32xf32, #tpu.memory_space<vmem>>, %arg5: memref<1x32x16xf32, #tpu.memory_space<vmem>>, %arg6: memref<1x16x32xf32, #tpu.memory_space<vmem>>, %arg7: memref<2x8x32xf32, #tpu.memory_space<vmem>>, %arg8: memref<2x8x32xf32, #tpu.memory_space<vmem>>) attributes {dimension_semantics = [#tpu.dimension_semantics<parallel>, #tpu.dimension_semantics<arbitrary>], iteration_bounds = array<i64: 1, 2>, scalar_prefetch = 0 : i64, scratch_operands = 1 : i64, tpu.core_type = #tpu.core_type<tc>, window_params = [{transform_indices = @transform_0, window_bounds = array<i64: 2, 8, 32>}, {transform_indices = @transform_1, window_bounds = array<i64: 2, 8, 32>}, {transform_indices = @transform_2, window_bounds = array<i64: 2, 8, 32>}, {transform_indices = @transform_3, window_bounds = array<i64: 1, 32, 16>}, {transform_indices = @transform_4, window_bounds = array<i64: 1, 16, 32>}, {transform_indices = @transform_5, window_bounds = array<i64: 2, 8, 32>}]} {
    %c0_i32 = arith.constant 0 : i32
    %0 = arith.cmpi eq, %arg1, %c0_i32 : i32
    %1 = arith.extui %0 : i1 to i32
    %c0_i32_0 = arith.constant 0 : i32
    %2 = arith.cmpi ne, %1, %c0_i32_0 : i32
    scf.if %2 {
      %cst_30 = arith.constant 0.000000e+00 : f32
      %42 = vector.broadcast %cst_30 : f32 to vector<2x8x32xf32>
      %c0_31 = arith.constant 0 : index
      %c0_32 = arith.constant 0 : index
      %c0_33 = arith.constant 0 : index
      %43 = vector.load %arg8[%c0_31, %c0_32, %c0_33] : memref<2x8x32xf32, #tpu.memory_space<vmem>>, vector<2x8x32xf32>
      tpu.vector_store %arg8[%c0_31, %c0_32, %c0_33], %42 {strides = array<i32>} : memref<2x8x32xf32, #tpu.memory_space<vmem>>, vector<2x8x32xf32>,
    } else {
    }
    %c0 = arith.constant 0 : index
    %c0_1 = arith.constant 0 : index
    %c0_2 = arith.constant 0 : index
    %3 = vector.load %arg5[%c0, %c0_1, %c0_2] : memref<1x32x16xf32, #tpu.memory_space<vmem>>, vector<1x32x16xf32>
    %4 = vector.shape_cast %3 : vector<1x32x16xf32> to vector<32x16xf32>
    %c0_3 = arith.constant 0 : index
    %c0_4 = arith.constant 0 : index
    %c0_5 = arith.constant 0 : index
    %5 = vector.load %arg2[%c0_3, %c0_4, %c0_5] : memref<2x8x32xf32, #tpu.memory_space<vmem>>, vector<2x8x32xf32>
    %6 = vector.shape_cast %5 : vector<2x8x32xf32> to vector<16x32xf32>
    %c0_6 = arith.constant 0 : index
    %c0_7 = arith.constant 0 : index
    %c0_8 = arith.constant 0 : index
    %7 = vector.load %arg3[%c0_6, %c0_7, %c0_8] : memref<2x8x32xf32, #tpu.memory_space<vmem>>, vector<2x8x32xf32>
    %8 = vector.shape_cast %7 : vector<2x8x32xf32> to vector<16x32xf32>
    %c0_9 = arith.constant 0 : index
    %c0_10 = arith.constant 0 : index
    %c0_11 = arith.constant 0 : index
    %9 = vector.load %arg4[%c0_9, %c0_10, %c0_11] : memref<2x8x32xf32, #tpu.memory_space<vmem>>, vector<2x8x32xf32>
    %10 = vector.shape_cast %9 : vector<2x8x32xf32> to vector<16x32xf32>
    %cst = arith.constant dense<0.000000e+00> : vector<16x16xf32>
    %11 = tpu.matmul %6, %4, %cst {dimension_numbers = #tpu.dot_dimension_numbers<[1], [0], [0], [1], [0, 0, 1, 1], [], []>} : vector<16x32xf32>, vector<32x16xf32>, vector<16x16xf32> -> vector<16x16xf32>
    %cst_12 = arith.constant dense<0.000000e+00> : vector<16x16xf32>
    %12 = tpu.matmul %8, %4, %cst_12 {dimension_numbers = #tpu.dot_dimension_numbers<[1], [0], [0], [1], [0, 0, 1, 1], [], []>} : vector<16x32xf32>, vector<32x16xf32>, vector<16x16xf32> -> vector<16x16xf32>
    %cst_13 = arith.constant dense<0.000000e+00> : vector<16x16xf32>
    %13 = tpu.matmul %10, %4, %cst_13 {dimension_numbers = #tpu.dot_dimension_numbers<[1], [0], [0], [1], [0, 0, 1, 1], [], []>} : vector<16x32xf32>, vector<32x16xf32>, vector<16x16xf32> -> vector<16x16xf32>
    %c0_14 = arith.constant 0 : index
    %c0_15 = arith.constant 0 : index
    %c0_16 = arith.constant 0 : index
    %14 = vector.load %arg6[%c0_14, %c0_15, %c0_16] : memref<1x16x32xf32, #tpu.memory_space<vmem>>, vector<1x16x32xf32>
    %15 = vector.shape_cast %14 : vector<1x16x32xf32> to vector<16x32xf32>
    %cst_17 = arith.constant 2.500000e-01 : f32
    %16 = vector.broadcast %cst_17 : f32 to vector<16x16xf32>
    %17 = arith.mulf %11, %16 : vector<16x16xf32>
    %18 = vector.shape_cast %17 : vector<16x16xf32> to vector<2x8x16xf32>
    %19 = vector.shape_cast %12 : vector<16x16xf32> to vector<2x8x16xf32>
    %20 = vector.shape_cast %13 : vector<16x16xf32> to vector<2x8x16xf32>
    "tpu.trace_start"() <{level = 10 : i32, message = "bqd,bkd->bqk"}> : () -> ()
    %cst_18 = arith.constant dense<0.000000e+00> : vector<2x8x8xf32>
    %21 = tpu.matmul %18, %19, %cst_18 {dimension_numbers = #tpu.dot_dimension_numbers<[2], [2], [1], [1], [0, 0, 0, 1, 1, 1], [0], [0]>} : vector<2x8x16xf32>, vector<2x8x16xf32>, vector<2x8x8xf32> -> vector<2x8x8xf32>
    "tpu.trace_stop"() : () -> ()
    %cst_19 = arith.constant dense<0xFF800000> : vector<2x8xf32>
    %22 = vector.multi_reduction <maximumf>, %21, %cst_19 [2] : vector<2x8x8xf32> to vector<2x8xf32>
    %23 = vector.shape_cast %22 : vector<2x8xf32> to vector<2x8x1xf32>
    %24 = vector.broadcast %23 : vector<2x8x1xf32> to vector<2x8x8xf32>
    %25 = arith.subf %21, %24 : vector<2x8x8xf32>
    %26 = math.exp %25 : vector<2x8x8xf32>
    %cst_20 = arith.constant dense<0.000000e+00> : vector<2x8xf32>
    %27 = vector.multi_reduction <add>, %26, %cst_20 [2] : vector<2x8x8xf32> to vector<2x8xf32>
    %28 = vector.shape_cast %27 : vector<2x8xf32> to vector<2x8x1xf32>
    %29 = tpu.reciprocal %28 : vector<2x8x1xf32> -> vector<2x8x1xf32>
    %30 = vector.broadcast %29 : vector<2x8x1xf32> to vector<2x8x8xf32>
    %31 = arith.mulf %26, %30 : vector<2x8x8xf32>
    "tpu.trace_start"() <{level = 10 : i32, message = "bqk,bkd->bqd"}> : () -> ()
    %cst_21 = arith.constant dense<0.000000e+00> : vector<2x8x16xf32>
    %32 = tpu.matmul %31, %20, %cst_21 {dimension_numbers = #tpu.dot_dimension_numbers<[2], [1], [1], [2], [0, 0, 0, 1, 1, 2], [0], [0]>} : vector<2x8x8xf32>, vector<2x8x16xf32>, vector<2x8x16xf32> -> vector<2x8x16xf32>
    "tpu.trace_stop"() : () -> ()
    %33 = vector.shape_cast %32 : vector<2x8x16xf32> to vector<16x16xf32>
    %cst_22 = arith.constant dense<0.000000e+00> : vector<16x32xf32>
    %34 = tpu.matmul %33, %15, %cst_22 {dimension_numbers = #tpu.dot_dimension_numbers<[1], [0], [0], [1], [0, 0, 1, 1], [], []>} : vector<16x16xf32>, vector<16x32xf32>, vector<16x32xf32> -> vector<16x32xf32>
    %c0_23 = arith.constant 0 : index
    %c0_24 = arith.constant 0 : index
    %c0_25 = arith.constant 0 : index
    %35 = vector.load %arg8[%c0_23, %c0_24, %c0_25] : memref<2x8x32xf32, #tpu.memory_space<vmem>>, vector<2x8x32xf32>
    %36 = vector.shape_cast %34 : vector<16x32xf32> to vector<2x8x32xf32>
    %37 = arith.addf %35, %36 : vector<2x8x32xf32>
    %c0_26 = arith.constant 0 : index
    %c0_27 = arith.constant 0 : index
    %c0_28 = arith.constant 0 : index
    %38 = vector.load %arg8[%c0_26, %c0_27, %c0_28] : memref<2x8x32xf32, #tpu.memory_space<vmem>>, vector<2x8x32xf32>
    tpu.vector_store %arg8[%c0_26, %c0_27, %c0_28], %37 {strides = array<i32>} : memref<2x8x32xf32, #tpu.memory_space<vmem>>, vector<2x8x32xf32>,
    %c1_i32 = arith.constant 1 : i32
    %39 = arith.cmpi eq, %arg1, %c1_i32 : i32
    %40 = arith.extui %39 : i1 to i32
    %c0_i32_29 = arith.constant 0 : i32
    %41 = arith.cmpi ne, %40, %c0_i32_29 : i32
    scf.if %41 {
      %c0_30 = arith.constant 0 : index
      %c0_31 = arith.constant 0 : index
      %c0_32 = arith.constant 0 : index
      %42 = vector.load %arg8[%c0_30, %c0_31, %c0_32] : memref<2x8x32xf32, #tpu.memory_space<vmem>>, vector<2x8x32xf32>
      %c0_33 = arith.constant 0 : index
      %c0_34 = arith.constant 0 : index
      %c0_35 = arith.constant 0 : index
      %43 = vector.load %arg7[%c0_33, %c0_34, %c0_35] : memref<2x8x32xf32, #tpu.memory_space<vmem>>, vector<2x8x32xf32>
      tpu.vector_store %arg7[%c0_33, %c0_34, %c0_35], %42 {strides = array<i32>} : memref<2x8x32xf32, #tpu.memory_space<vmem>>, vector<2x8x32xf32>,
    } else {
    }
    return
  }
  func.func @transform_0(%arg0: i32, %arg1: i32) -> (i32, i32, i32) {
    %c0_i32 = arith.constant 0 : i32
    %c0_i32_0 = arith.constant 0 : i32
    %c0_i32_1 = arith.constant 0 : i32
    return %arg0, %c0_i32, %c0_i32_0 : i32, i32, i32
  }
  func.func @transform_1(%arg0: i32, %arg1: i32) -> (i32, i32, i32) {
    %c0_i32 = arith.constant 0 : i32
    %c0_i32_0 = arith.constant 0 : i32
    %c0_i32_1 = arith.constant 0 : i32
    return %arg0, %c0_i32, %c0_i32_0 : i32, i32, i32
  }
  func.func @transform_2(%arg0: i32, %arg1: i32) -> (i32, i32, i32) {
    %c0_i32 = arith.constant 0 : i32
    %c0_i32_0 = arith.constant 0 : i32
    %c0_i32_1 = arith.constant 0 : i32
    return %arg0, %c0_i32, %c0_i32_0 : i32, i32, i32
  }
  func.func @transform_3(%arg0: i32, %arg1: i32) -> (i32, i32, i32) {
    %c0_i32 = arith.constant 0 : i32
    %c0_i32_0 = arith.constant 0 : i32
    %c0_i32_1 = arith.constant 0 : i32
    return %arg1, %c0_i32, %c0_i32_0 : i32, i32, i32
  }
  func.func @transform_4(%arg0: i32, %arg1: i32) -> (i32, i32, i32) {
    %c0_i32 = arith.constant 0 : i32
    %c0_i32_0 = arith.constant 0 : i32
    %c0_i32_1 = arith.constant 0 : i32
    return %arg1, %c0_i32, %c0_i32_0 : i32, i32, i32
  }
  func.func @transform_5(%arg0: i32, %arg1: i32) -> (i32, i32, i32) {
    %c0_i32 = arith.constant 0 : i32
    %c0_i32_0 = arith.constant 0 : i32
    %c0_i32_1 = arith.constant 0 : i32
    return %arg0, %c0_i32, %c0_i32_0 : i32, i32, i32
  }
}

</mosaic_0001>

<llo_original>
// kernel: tpu_custom_call.1
$region0: #{tpu_custom_call.1}
  #allocation0 [shape = 'u32[]', space=smem, size = 0x4, offset = 0x4, fixed_abs, tag = 'smem constant byte address 0x4 - core index']
  #allocation1 [shape = 'u32[144,128]{1,0:T(1,128)}', space=vmem, size = 0x12000, scoped, tag = 'internal scratch']
  #allocation2 [shape = 'f32[2,8,32]{2,1,0:T(8,128)}', space=vmem, size = 0x2000, scoped, tag = 'scratch operand']
  %s0 = inlined_call_operand.vmem [shape: f32[2,8,32], index: 0, kind: input, shape index: {}]
  %s1 = inlined_call_operand.vmem [shape: f32[2,8,32], index: 1, kind: input, shape index: {}]
  %s2 = inlined_call_operand.vmem [shape: f32[2,8,32], index: 2, kind: input, shape index: {}]
  %s3 = inlined_call_operand.vmem [shape: f32[2,32,16], index: 3, kind: input, shape index: {}]
  %s4 = inlined_call_operand.vmem [shape: f32[2,16,32], index: 4, kind: input, shape index: {}]
  %s5 = inlined_call_operand.hbm [shape: f32[2,8,32], index: 5, kind: output, shape index: {}]
  %s6 = sld [smem:[#allocation0]]
  $region61: #{tpu_custom_call.1} parent=0
    _
  %s8 = ssub.s32 1, %s6
  %s9 = scalar_select 0, %s8, %s6
  $region1: #{tpu_custom_call.1} parent=0
    #allocation3 [shape = 'u8[8192]{0}', space=vmem, size = 0x2000, scoped, tag = 'output window, operand 0, single buffered']
    #allocation4 [shape = 's32[2]{0}', space=sflag, size = 0x8, scoped, tag = 'scoped memory for tpu_custom_call.1']
    %10 = vsyncpa [#allocation4], 0
    loop: start=0, step=1, limit=4
    $region2: #{tpu_custom_call.1} parent=1 // loop_pre_header
      _
    $region3: #{tpu_custom_call.1} parent=1 // loop_header
      %s12 = sphi 0, %s16
      %p13 = scmp.ge.s32.totalorder %s12, 4
      %s19 = sphi 0, %s31
      %s20 = sphi 0, %s27
      %s21 = sphi 0, %s19
      %s22 = sphi 0, %s20
      %s23 = sphi 0, %s21
      %s24 = sphi 0, %s22
      %s34 = sphi 0, %s36
      %s37 = sphi 0, %s34
      %s38 = sphi 0, %s37
      %s54 = sphi 0, %s38
      %s60 = sphi 0, %s62
      %s63 = sphi 0, %s60
      %s64 = sphi 0, %s63
      %s80 = sphi 0, %s64
      %s86 = sphi 0, %s88
      %s89 = sphi 0, %s86
      %s90 = sphi 0, %s89
      %s106 = sphi 0, %s90
      %s112 = sphi 0, %s114
      %s115 = sphi 0, %s112
      %s116 = sphi 0, %s115
      %s132 = sphi 0, %s116
      %s138 = sphi 0, %s140
      %s141 = sphi 0, %s138
      %s142 = sphi 0, %s141
      %s158 = sphi 0, %s142
      %s164 = sphi 0, %s166
      %s167 = sphi 0, %s164
      %s168 = sphi 0, %s167
      %s184 = sphi 0, %s168
    $region4: #{tpu_custom_call.1} parent=1 // loop_header_branch
      %15 = sbr.rel (%p13) target = $region8
    $region5: #{tpu_custom_call.1} parent=1 // loop_body
      %s17 = ssub.s32 %s12, 1
      %s18 = ssub.s32 %s12, 2
      %s25 = sadd.s32 1, %s20
      %p26 = scmp.ge.s32.totalorder %s25, 2
      %s27 = scalar_select %p26, 0, %s25
      %s28 = sadd.s32 1, %s19
      %s29 = scalar_select %p26, %s28, %s19
      %p30 = scmp.ge.s32.totalorder %s29, 1
      %s31 = scalar_select %p30, 0, %s29
      %s32 = ssub.s32 %s19, %s31
      %p33 = scmp.eq.s32.totalorder %s32, 0
      %s35 = sadd.s32 %s34, 1
      %s36 = scalar_select %p33, %s34, %s35
      %p39 = pneg %p33
      %p40 = scmp.eq.s32.totalorder %s12, 1
      %p41 = por %p39, %p40
      %p42 = scmp.ne.s32.totalorder %s34, %s37
      %p43 = scmp.eq.s32.totalorder %s12, 0
      %p44 = por %p42, %p43
      %p45 = scmp.ne.s32.totalorder %s34, %s37
      %p46 = scmp.eq.s32.totalorder %s17, 1
      %p47 = por %p45, %p46
      %p48 = scmp.ne.s32.totalorder %s37, %s38
      %p49 = scmp.eq.s32.totalorder %s17, 0
      %p50 = por %p48, %p49
      %p51 = scmp.ne.s32.totalorder %s37, %s38
      %p52 = scmp.eq.s32.totalorder %s18, 1
      %p53 = por %p51, %p52
      %p55 = scmp.ne.s32.totalorder %s38, %s54
      %p56 = scmp.eq.s32.totalorder %s18, 0
      %p57 = por %p55, %p56
      %s58 = ssub.s32 %s19, %s31
      %p59 = scmp.eq.s32.totalorder %s58, 0
      %s61 = sadd.s32 %s60, 1
      %s62 = scalar_select %p59, %s60, %s61
      %p65 = pneg %p59
      %p66 = scmp.eq.s32.totalorder %s12, 1
      %p67 = por %p65, %p66
      %p68 = scmp.ne.s32.totalorder %s60, %s63
      %p69 = scmp.eq.s32.totalorder %s12, 0
      %p70 = por %p68, %p69
      %p71 = scmp.ne.s32.totalorder %s60, %s63
      %p72 = scmp.eq.s32.totalorder %s17, 1
      %p73 = por %p71, %p72
      %p74 = scmp.ne.s32.totalorder %s63, %s64
      %p75 = scmp.eq.s32.totalorder %s17, 0
      %p76 = por %p74, %p75
      %p77 = scmp.ne.s32.totalorder %s63, %s64
      %p78 = scmp.eq.s32.totalorder %s18, 1
      %p79 = por %p77, %p78
      %p81 = scmp.ne.s32.totalorder %s64, %s80
      %p82 = scmp.eq.s32.totalorder %s18, 0
      %p83 = por %p81, %p82
      %s84 = ssub.s32 %s19, %s31
      %p85 = scmp.eq.s32.totalorder %s84, 0
      %s87 = sadd.s32 %s86, 1
      %s88 = scalar_select %p85, %s86, %s87
      %p91 = pneg %p85
      %p92 = scmp.eq.s32.totalorder %s12, 1
      %p93 = por %p91, %p92
      %p94 = scmp.ne.s32.totalorder %s86, %s89
      %p95 = scmp.eq.s32.totalorder %s12, 0
      %p96 = por %p94, %p95
      %p97 = scmp.ne.s32.totalorder %s86, %s89
      %p98 = scmp.eq.s32.totalorder %s17, 1
      %p99 = por %p97, %p98
      %p100 = scmp.ne.s32.totalorder %s89, %s90
      %p101 = scmp.eq.s32.totalorder %s17, 0
      %p102 = por %p100, %p101
      %p103 = scmp.ne.s32.totalorder %s89, %s90
      %p104 = scmp.eq.s32.totalorder %s18, 1
      %p105 = por %p103, %p104
      %p107 = scmp.ne.s32.totalorder %s90, %s106
      %p108 = scmp.eq.s32.totalorder %s18, 0
      %p109 = por %p107, %p108
      %s110 = ssub.s32 %s20, %s27
      %p111 = scmp.eq.s32.totalorder %s110, 0
      %s113 = sadd.s32 %s112, 1
      %s114 = scalar_select %p111, %s112, %s113
      %p117 = pneg %p111
      %p118 = scmp.eq.s32.totalorder %s12, 1
      %p119 = por %p117, %p118
      %p120 = scmp.ne.s32.totalorder %s112, %s115
      %p121 = scmp.eq.s32.totalorder %s12, 0
      %p122 = por %p120, %p121
      %p123 = scmp.ne.s32.totalorder %s112, %s115
      %p124 = scmp.eq.s32.totalorder %s17, 1
      %p125 = por %p123, %p124
      %p126 = scmp.ne.s32.totalorder %s115, %s116
      %p127 = scmp.eq.s32.totalorder %s17, 0
      %p128 = por %p126, %p127
      %p129 = scmp.ne.s32.totalorder %s115, %s116
      %p130 = scmp.eq.s32.totalorder %s18, 1
      %p131 = por %p129, %p130
      %p133 = scmp.ne.s32.totalorder %s116, %s132
      %p134 = scmp.eq.s32.totalorder %s18, 0
      %p135 = por %p133, %p134
      %s136 = ssub.s32 %s20, %s27
      %p137 = scmp.eq.s32.totalorder %s136, 0
      %s139 = sadd.s32 %s138, 1
      %s140 = scalar_select %p137, %s138, %s139
      %p143 = pneg %p137
      %p144 = scmp.eq.s32.totalorder %s12, 1
      %p145 = por %p143, %p144
      %p146 = scmp.ne.s32.totalorder %s138, %s141
      %p147 = scmp.eq.s32.totalorder %s12, 0
      %p148 = por %p146, %p147
      %p149 = scmp.ne.s32.totalorder %s138, %s141
      %p150 = scmp.eq.s32.totalorder %s17, 1
      %p151 = por %p149, %p150
      %p152 = scmp.ne.s32.totalorder %s141, %s142
      %p153 = scmp.eq.s32.totalorder %s17, 0
      %p154 = por %p152, %p153
      %p155 = scmp.ne.s32.totalorder %s141, %s142
      %p156 = scmp.eq.s32.totalorder %s18, 1
      %p157 = por %p155, %p156
      %p159 = scmp.ne.s32.totalorder %s142, %s158
      %p160 = scmp.eq.s32.totalorder %s18, 0
      %p161 = por %p159, %p160
      %s162 = ssub.s32 %s19, %s31
      %p163 = scmp.eq.s32.totalorder %s162, 0
      %s165 = sadd.s32 %s164, 1
      %s166 = scalar_select %p163, %s164, %s165
      %p169 = pneg %p163
      %p170 = scmp.eq.s32.totalorder %s12, 1
      %p171 = por %p169, %p170
      %p172 = scmp.ne.s32.totalorder %s164, %s167
      %p173 = scmp.eq.s32.totalorder %s12, 0
      %p174 = por %p172, %p173
      %p175 = scmp.ne.s32.totalorder %s164, %s167
      %p176 = scmp.eq.s32.totalorder %s17, 1
      %p177 = por %p175, %p176
      %p178 = scmp.ne.s32.totalorder %s167, %s168
      %p179 = scmp.eq.s32.totalorder %s17, 0
      %p180 = por %p178, %p179
      %p181 = scmp.ne.s32.totalorder %s167, %s168
      %p182 = scmp.eq.s32.totalorder %s18, 1
      %p183 = por %p181, %p182
      %p185 = scmp.ne.s32.totalorder %s168, %s184
      %p186 = scmp.eq.s32.totalorder %s18, 0
      %p187 = por %p185, %p186
      %p188 = scmp.le.s32.totalorder 1, %s12
      %p189 = scmp.lt.s32.totalorder %s12, 3
      %p190 = pnand %p188, %p189
      %p191 = pneg %p190
      // Predicated region
      $region9: #{tpu_custom_call.1} parent=5 // pred_check
        _
      $region10: #{tpu_custom_call.1} parent=5 // pred_check_branch
        %193 = sbr.rel (%p190) target = $region12
      $region11: #{tpu_custom_call.1} parent=5 // pred_region
        %s194 = ssub.s32 %s12, 1
        // Predicated region
        $region13: #{tpu_custom_call.1} parent=11 // pred_check
          %p195 = pneg %p50
        $region14: #{tpu_custom_call.1} parent=11 // pred_check_branch
          %197 = sbr.rel (%p195) target = $region16
        $region15: #{tpu_custom_call.1} parent=11 // pred_region
          %s198 = smul.u32 2, %s21
          %p199 = scmp.lt.s32.totalorder %s198, 1
          %s200 = scalar_select %p199, %s198, 1
          %s201 = smul.addr %s200, 8
          %s202 = scalar_lea.vmem %s0, %s201
          %s203 = smul.u32 2, %s21
        $region16: #{tpu_custom_call.1} parent=11 // pred_fallthru
          _
        // Predicated region
        $region17: #{tpu_custom_call.1} parent=11 // pred_check
          %p204 = pneg %p76
        $region18: #{tpu_custom_call.1} parent=11 // pred_check_branch
          %206 = sbr.rel (%p204) target = $region20
        $region19: #{tpu_custom_call.1} parent=11 // pred_region
          %s207 = smul.u32 2, %s21
          %p208 = scmp.lt.s32.totalorder %s207, 1
          %s209 = scalar_select %p208, %s207, 1
          %s210 = smul.addr %s209, 8
          %s211 = scalar_lea.vmem %s1, %s210
          %s212 = smul.u32 2, %s21
        $region20: #{tpu_custom_call.1} parent=11 // pred_fallthru
          _
        // Predicated region
        $region21: #{tpu_custom_call.1} parent=11 // pred_check
          %p213 = pneg %p102
        $region22: #{tpu_custom_call.1} parent=11 // pred_check_branch
          %215 = sbr.rel (%p213) target = $region24
        $region23: #{tpu_custom_call.1} parent=11 // pred_region
          %s216 = smul.u32 2, %s21
          %p217 = scmp.lt.s32.totalorder %s216, 1
          %s218 = scalar_select %p217, %s216, 1
          %s219 = smul.addr %s218, 8
          %s220 = scalar_lea.vmem %s2, %s219
          %s221 = smul.u32 2, %s21
        $region24: #{tpu_custom_call.1} parent=11 // pred_fallthru
          _
      $region12: #{tpu_custom_call.1} parent=5 // pred_fallthru
        _
      %p222 = scmp.lt.s32.totalorder %s12, 2
      // Predicated region
      $region25: #{tpu_custom_call.1} parent=5 // pred_check
        %p223 = pneg %p222
      $region26: #{tpu_custom_call.1} parent=5 // pred_check_branch
        %225 = sbr.rel (%p223) target = $region28
      $region27: #{tpu_custom_call.1} parent=5 // pred_region
        // Predicated region
        $region29: #{tpu_custom_call.1} parent=27 // pred_check
          %p226 = pneg %p122
        $region30: #{tpu_custom_call.1} parent=27 // pred_check_branch
          %228 = sbr.rel (%p226) target = $region32
        $region31: #{tpu_custom_call.1} parent=27 // pred_region
          %p229 = scmp.lt.s32.totalorder %s20, 1
          %s230 = scalar_select %p229, %s20, 1
          %s231 = smul.addr %s230, 4
          %s232 = smul.addr %s231, 8
          %s233 = scalar_lea.vmem %s3, %s232
        $region32: #{tpu_custom_call.1} parent=27 // pred_fallthru
          _
        // Predicated region
        $region33: #{tpu_custom_call.1} parent=27 // pred_check
          %p234 = pneg %p148
        $region34: #{tpu_custom_call.1} parent=27 // pred_check_branch
          %236 = sbr.rel (%p234) target = $region36
        $region35: #{tpu_custom_call.1} parent=27 // pred_region
          %p237 = scmp.lt.s32.totalorder %s20, 1
          %s238 = scalar_select %p237, %s20, 1
          %s239 = smul.addr %s238, 2
          %s240 = smul.addr %s239, 8
          %s241 = scalar_lea.vmem %s4, %s240
        $region36: #{tpu_custom_call.1} parent=27 // pred_fallthru
          _
      $region28: #{tpu_custom_call.1} parent=5 // pred_fallthru
        _
      %p242 = scmp.le.s32.totalorder 1, %s12
      %p243 = scmp.lt.s32.totalorder %s12, 3
      %p244 = pnand %p242, %p243
      %p245 = pneg %p244
      // Predicated region
      $region37: #{tpu_custom_call.1} parent=5 // pred_check
        _
      $region38: #{tpu_custom_call.1} parent=5 // pred_check_branch
        %247 = sbr.rel (%p244) target = $region40
      $region39: #{tpu_custom_call.1} parent=5 // pred_region
        %s248 = ssub.s32 %s12, 1
        %s249 = smul.u32 2, %s21
        %p250 = scmp.lt.s32.totalorder %s249, 1
        %s251 = scalar_select %p250, %s249, 1
        %s252 = smul.addr %s251, 8
        %s253 = scalar_lea.vmem %s0, %s252
        %p254 = pneg %p50
        %p255 = pneg %p47
        %s256 = smul.u32 2, %s21
        %p257 = scmp.lt.s32.totalorder %s256, 1
        %s258 = scalar_select %p257, %s256, 1
        %s259 = smul.addr %s258, 8
        %s260 = scalar_lea.vmem %s1, %s259
        %p261 = pneg %p76
        %p262 = pneg %p73
        %s263 = smul.u32 2, %s21
        %p264 = scmp.lt.s32.totalorder %s263, 1
        %s265 = scalar_select %p264, %s263, 1
        %s266 = smul.addr %s265, 8
        %s267 = scalar_lea.vmem %s2, %s266
        %p268 = pneg %p102
        %p269 = pneg %p99
        %p270 = scmp.lt.s32.totalorder %s22, 1
        %s271 = scalar_select %p270, %s22, 1
        %s272 = smul.addr %s271, 4
        %s273 = smul.addr %s272, 8
        %s274 = scalar_lea.vmem %s3, %s273
        %p275 = pneg %p128
        %p276 = pneg %p125
        %p277 = scmp.lt.s32.totalorder %s22, 1
        %s278 = scalar_select %p277, %s22, 1
        %s279 = smul.addr %s278, 2
        %s280 = smul.addr %s279, 8
        %s281 = scalar_lea.vmem %s4, %s280
        %p282 = pneg %p154
        %p283 = pneg %p151
        %p284 = pneg %p180
        %p285 = pneg %p177
        %s286 = smul.u32 2, %s21
        %p287 = scmp.lt.s32.totalorder %s286, 1
        %s288 = scalar_select %p287, %s286, 1
        %s289 = smul.addr %s288, 8
        %s290 = scalar_lea.vmem %s0, %s289
        %s291 = smul.u32 2, %s21
        %s292 = smul.u32 2, %s21
        %p293 = scmp.lt.s32.totalorder %s292, 1
        %s294 = scalar_select %p293, %s292, 1
        %s295 = smul.addr %s294, 8
        %s296 = scalar_lea.vmem %s1, %s295
        %s297 = smul.u32 2, %s21
        %s298 = smul.u32 2, %s21
        %p299 = scmp.lt.s32.totalorder %s298, 1
        %s300 = scalar_select %p299, %s298, 1
        %s301 = smul.addr %s300, 8
        %s302 = scalar_lea.vmem %s2, %s301
        %s303 = smul.u32 2, %s21
        %p304 = scmp.lt.s32.totalorder %s22, 1
        %s305 = scalar_select %p304, %s22, 1
        %s306 = smul.addr %s305, 4
        %s307 = smul.addr %s306, 8
        %s308 = scalar_lea.vmem %s3, %s307
        %p309 = scmp.lt.s32.totalorder %s22, 1
        %s310 = scalar_select %p309, %s22, 1
        %s311 = smul.addr %s310, 2
        %s312 = smul.addr %s311, 8
        %s313 = scalar_lea.vmem %s4, %s312
        %s314 = smul.u32 2, %s21
        %p315 = scmp.eq.s32.totalorder %s22, 0
        // Predicated region
        $region41: #{tpu_custom_call.1} parent=39 // pred_check
          %p316 = pneg %p315
        $region42: #{tpu_custom_call.1} parent=39 // pred_check_branch
          %318 = sbr.rel (%p316) target = $region44
        $region43: #{tpu_custom_call.1} parent=39 // pred_region
          %vm319 = vcmask 261120
          %320 = vst.msk [vmem:[#allocation2] sm:$0xff] %vm319, 0.0
          %321 = vst.msk [vmem:[#allocation2 + $0x8] sm:$0xff] %vm319, 0.0
        $region44: #{tpu_custom_call.1} parent=39 // pred_fallthru
          _
        %v322 = vld [vmem:[%s308] sm:$0xff]
        %v323 = vld [vmem:[%s308 + $0x8] sm:$0xff]
        %v324 = vld [vmem:[%s308 + $0x10] sm:$0xff]
        %v325 = vld [vmem:[%s308 + $0x18] sm:$0xff]
        %v326 = vld [vmem:[%s290] sm:$0xff]
        %v327 = vld [vmem:[%s290 + $0x8] sm:$0xff]
        %v328 = vld [vmem:[%s296] sm:$0xff]
        %v329 = vld [vmem:[%s296 + $0x8] sm:$0xff]
        %v330 = vld [vmem:[%s302] sm:$0xff]
        %v331 = vld [vmem:[%s302 + $0x8] sm:$0xff]
        %vm332 = vcmask 261120
        %v334 = vsel %vm332, %v326, 0
        %v337 = vsel %vm332, %v327, 0
        %339 = vmatprep.subr.mxu0 0.0
        %340 = vmatpush1.msra.mxu0 %v322
        %341 = vmatprep.subr.mxu0 0.0
        %342 = vmatpush1.msra.mxu0 %v323
        %343 = vmatprep.subr.mxu0 0.0
        %344 = vmatpush1.msra.mxu0 %v324
        %345 = vmatprep.subr.mxu0 0.0
        %346 = vmatpush1.msra.mxu0 %v325
        %347 = vmatprep.subr.mxu0 0.0
        %348 = vmatpush1.msra.mxu0 0.0
        %349 = vmatprep.subr.mxu0 0.0
        %350 = vmatpush1.msra.mxu0 0.0
        %351 = vmatprep.subr.mxu0 0.0
        %352 = vmatpush1.msra.mxu0 0.0
        %353 = vmatprep.subr.mxu0 0.0
        %354 = vmatpush1.msra.mxu0 0.0
        %355 = vmatprep.subr.mxu0 0.0
        %356 = vmatpush1.msra.mxu0 0.0
        %357 = vmatprep.subr.mxu0 0.0
        %358 = vmatpush1.msra.mxu0 0.0
        %359 = vmatprep.subr.mxu0 0.0
        %360 = vmatpush1.msra.mxu0 0.0
        %361 = vmatprep.subr.mxu0 0.0
        %362 = vmatpush1.msra.mxu0 0.0
        %363 = vmatprep.subr.mxu0 0.0
        %364 = vmatpush1.msra.mxu0 0.0
        %365 = vmatprep.subr.mxu0 0.0
        %366 = vmatpush1.msra.mxu0 0.0
        %367 = vmatprep.subr.mxu0 0.0
        %368 = vmatpush1.msra.mxu0 0.0
        %369 = vmatprep.subr.mxu0 0.0
        %370 = vmatpush1.msra.mxu0 0.0
        %371 = vmatprep.subr.mxu0 0.0
        %372 = vmatpush1.msra.mxu0 0.0
        %373 = vmatprep.subr.mxu0 0.0
        %374 = vmatpush1.msra.mxu0 0.0
        %375 = vmatprep.subr.mxu0 0.0
        %376 = vmatpush1.msra.mxu0 0.0
        %377 = vmatprep.subr.mxu0 0.0
        %378 = vmatpush1.msra.mxu0 0.0
        %379 = vmatprep.subr.mxu0 0.0
        %380 = vmatpush1.msra.mxu0 0.0
        %381 = vmatprep.subr.mxu0 0.0
        %382 = vmatpush1.msra.mxu0 0.0
        %383 = vmatprep.subr.mxu0 0.0
        %384 = vmatpush1.msra.mxu0 0.0
        %385 = vmatprep.subr.mxu0 0.0
        %386 = vmatpush1.msra.mxu0 0.0
        %387 = vmatprep.subr.mxu0 0.0
        %388 = vmatpush1.msra.mxu0 0.0
        %389 = vmatprep.subr.mxu0 0.0
        %390 = vmatpush1.msra.mxu0 0.0
        %391 = vmatprep.subr.mxu0 0.0
        %392 = vmatpush1.msra.mxu0 0.0
        %393 = vmatprep.subr.mxu0 0.0
        %394 = vmatpush1.msra.mxu0 0.0
        %395 = vmatprep.subr.mxu0 0.0
        %396 = vmatpush1.msra.mxu0 0.0
        %397 = vmatprep.subr.mxu0 0.0
        %398 = vmatpush1.msra.mxu0 0.0
        %399 = vmatprep.subr.mxu0 0.0
        %400 = vmatpush1.msra.mxu0 0.0
        %401 = vmatprep.subr.mxu0 0.0
        %402 = vmatpush1.msra.mxu0 0.0
        %403 = vmatprep.mubr.f32.mxu0 0.0
        %404 = vmatmul.mubr.f32.gmra.mrb[0].mxu0 %v334
        %v405 = vpop.f32.mrb[0].mxu0
        %v406 = vadd.f32 0.0, %v405
        %v407 = vpop.f32.mrb[0].mxu0
        %408 = vmatprep.mubr.f32.mxu0 0.0
        %409 = vmatmul.mubr.f32.gmra.mrb[0].mxu0 %v337
        %v410 = vpop.f32.mrb[0].mxu0
        %v411 = vadd.f32 0.0, %v410
        %v412 = vpop.f32.mrb[0].mxu0
        %413 = vdwg.mxu0
        %v415 = vsel %vm332, %v328, 0
        %v418 = vsel %vm332, %v329, 0
        %420 = vmatprep.subr.mxu0 0.0
        %421 = vmatpush1.msra.mxu0 %v322
        %422 = vmatprep.subr.mxu0 0.0
        %423 = vmatpush1.msra.mxu0 %v323
        %424 = vmatprep.subr.mxu0 0.0
        %425 = vmatpush1.msra.mxu0 %v324
        %426 = vmatprep.subr.mxu0 0.0
        %427 = vmatpush1.msra.mxu0 %v325
        %428 = vmatprep.subr.mxu0 0.0
        %429 = vmatpush1.msra.mxu0 0.0
        %430 = vmatprep.subr.mxu0 0.0
        %431 = vmatpush1.msra.mxu0 0.0
        %432 = vmatprep.subr.mxu0 0.0
        %433 = vmatpush1.msra.mxu0 0.0
        %434 = vmatprep.subr.mxu0 0.0
        %435 = vmatpush1.msra.mxu0 0.0
        %436 = vmatprep.subr.mxu0 0.0
        %437 = vmatpush1.msra.mxu0 0.0
        %438 = vmatprep.subr.mxu0 0.0
        %439 = vmatpush1.msra.mxu0 0.0
        %440 = vmatprep.subr.mxu0 0.0
        %441 = vmatpush1.msra.mxu0 0.0
        %442 = vmatprep.subr.mxu0 0.0
        %443 = vmatpush1.msra.mxu0 0.0
        %444 = vmatprep.subr.mxu0 0.0
        %445 = vmatpush1.msra.mxu0 0.0
        %446 = vmatprep.subr.mxu0 0.0
        %447 = vmatpush1.msra.mxu0 0.0
        %448 = vmatprep.subr.mxu0 0.0
        %449 = vmatpush1.msra.mxu0 0.0
        %450 = vmatprep.subr.mxu0 0.0
        %451 = vmatpush1.msra.mxu0 0.0
        %452 = vmatprep.subr.mxu0 0.0
        %453 = vmatpush1.msra.mxu0 0.0
        %454 = vmatprep.subr.mxu0 0.0
        %455 = vmatpush1.msra.mxu0 0.0
        %456 = vmatprep.subr.mxu0 0.0
        %457 = vmatpush1.msra.mxu0 0.0
        %458 = vmatprep.subr.mxu0 0.0
        %459 = vmatpush1.msra.mxu0 0.0
        %460 = vmatprep.subr.mxu0 0.0
        %461 = vmatpush1.msra.mxu0 0.0
        %462 = vmatprep.subr.mxu0 0.0
        %463 = vmatpush1.msra.mxu0 0.0
        %464 = vmatprep.subr.mxu0 0.0
        %465 = vmatpush1.msra.mxu0 0.0
        %466 = vmatprep.subr.mxu0 0.0
        %467 = vmatpush1.msra.mxu0 0.0
        %468 = vmatprep.subr.mxu0 0.0
        %469 = vmatpush1.msra.mxu0 0.0
        %470 = vmatprep.subr.mxu0 0.0
        %471 = vmatpush1.msra.mxu0 0.0
        %472 = vmatprep.subr.mxu0 0.0
        %473 = vmatpush1.msra.mxu0 0.0
        %474 = vmatprep.subr.mxu0 0.0
        %475 = vmatpush1.msra.mxu0 0.0
        %476 = vmatprep.subr.mxu0 0.0
        %477 = vmatpush1.msra.mxu0 0.0
        %478 = vmatprep.subr.mxu0 0.0
        %479 = vmatpush1.msra.mxu0 0.0
        %480 = vmatprep.subr.mxu0 0.0
        %481 = vmatpush1.msra.mxu0 0.0
        %482 = vmatprep.subr.mxu0 0.0
        %483 = vmatpush1.msra.mxu0 0.0
        %484 = vmatprep.mubr.f32.mxu0 0.0
        %485 = vmatmul.mubr.f32.gmra.mrb[0].mxu0 %v415
        %v486 = vpop.f32.mrb[0].mxu0
        %v487 = vadd.f32 0.0, %v486
        %v488 = vpop.f32.mrb[0].mxu0
        %489 = vmatprep.mubr.f32.mxu0 0.0
        %490 = vmatmul.mubr.f32.gmra.mrb[0].mxu0 %v418
        %v491 = vpop.f32.mrb[0].mxu0
        %v492 = vadd.f32 0.0, %v491
        %v493 = vpop.f32.mrb[0].mxu0
        %494 = vdwg.mxu0
        %v496 = vsel %vm332, %v330, 0
        %v499 = vsel %vm332, %v331, 0
        %501 = vmatprep.subr.mxu0 0.0
        %502 = vmatpush1.msra.mxu0 %v322
        %503 = vmatprep.subr.mxu0 0.0
        %504 = vmatpush1.msra.mxu0 %v323
        %505 = vmatprep.subr.mxu0 0.0
        %506 = vmatpush1.msra.mxu0 %v324
        %507 = vmatprep.subr.mxu0 0.0
        %508 = vmatpush1.msra.mxu0 %v325
        %509 = vmatprep.subr.mxu0 0.0
        %510 = vmatpush1.msra.mxu0 0.0
        %511 = vmatprep.subr.mxu0 0.0
        %512 = vmatpush1.msra.mxu0 0.0
        %513 = vmatprep.subr.mxu0 0.0
        %514 = vmatpush1.msra.mxu0 0.0
        %515 = vmatprep.subr.mxu0 0.0
        %516 = vmatpush1.msra.mxu0 0.0
        %517 = vmatprep.subr.mxu0 0.0
        %518 = vmatpush1.msra.mxu0 0.0
        %519 = vmatprep.subr.mxu0 0.0
        %520 = vmatpush1.msra.mxu0 0.0
        %521 = vmatprep.subr.mxu0 0.0
        %522 = vmatpush1.msra.mxu0 0.0
        %523 = vmatprep.subr.mxu0 0.0
        %524 = vmatpush1.msra.mxu0 0.0
        %525 = vmatprep.subr.mxu0 0.0
        %526 = vmatpush1.msra.mxu0 0.0
        %527 = vmatprep.subr.mxu0 0.0
        %528 = vmatpush1.msra.mxu0 0.0
        %529 = vmatprep.subr.mxu0 0.0
        %530 = vmatpush1.msra.mxu0 0.0
        %531 = vmatprep.subr.mxu0 0.0
        %532 = vmatpush1.msra.mxu0 0.0
        %533 = vmatprep.subr.mxu0 0.0
        %534 = vmatpush1.msra.mxu0 0.0
        %535 = vmatprep.subr.mxu0 0.0
        %536 = vmatpush1.msra.mxu0 0.0
        %537 = vmatprep.subr.mxu0 0.0
        %538 = vmatpush1.msra.mxu0 0.0
        %539 = vmatprep.subr.mxu0 0.0
        %540 = vmatpush1.msra.mxu0 0.0
        %541 = vmatprep.subr.mxu0 0.0
        %542 = vmatpush1.msra.mxu0 0.0
        %543 = vmatprep.subr.mxu0 0.0
        %544 = vmatpush1.msra.mxu0 0.0
        %545 = vmatprep.subr.mxu0 0.0
        %546 = vmatpush1.msra.mxu0 0.0
        %547 = vmatprep.subr.mxu0 0.0
        %548 = vmatpush1.msra.mxu0 0.0
        %549 = vmatprep.subr.mxu0 0.0
        %550 = vmatpush1.msra.mxu0 0.0
        %551 = vmatprep.subr.mxu0 0.0
        %552 = vmatpush1.msra.mxu0 0.0
        %553 = vmatprep.subr.mxu0 0.0
        %554 = vmatpush1.msra.mxu0 0.0
        %555 = vmatprep.subr.mxu0 0.0
        %556 = vmatpush1.msra.mxu0 0.0
        %557 = vmatprep.subr.mxu0 0.0
        %558 = vmatpush1.msra.mxu0 0.0
        %559 = vmatprep.subr.mxu0 0.0
        %560 = vmatpush1.msra.mxu0 0.0
        %561 = vmatprep.subr.mxu0 0.0
        %562 = vmatpush1.msra.mxu0 0.0
        %563 = vmatprep.subr.mxu0 0.0
        %564 = vmatpush1.msra.mxu0 0.0
        %565 = vmatprep.mubr.f32.mxu0 0.0
        %566 = vmatmul.mubr.f32.gmra.mrb[0].mxu0 %v496
        %v567 = vpop.f32.mrb[0].mxu0
        %v568 = vadd.f32 0.0, %v567
        %v569 = vpop.f32.mrb[0].mxu0
        %570 = vmatprep.mubr.f32.mxu0 0.0
        %571 = vmatmul.mubr.f32.gmra.mrb[0].mxu0 %v499
        %v572 = vpop.f32.mrb[0].mxu0
        %v573 = vadd.f32 0.0, %v572
        %v574 = vpop.f32.mrb[0].mxu0
        %575 = vdwg.mxu0
        %v576 = vld [vmem:[%s313] sm:$0xff]
        %v577 = vld [vmem:[%s313 + $0x8] sm:$0xff]
        %v578 = vmul.f32 %v406, 0.25
        %v579 = vmul.f32 %v411, 0.25
        %vm580 = vcmask 130048
        %v582 = vsel %vm580, %v578, 0
        %v585 = vsel %vm580, %v487, 0
        %587 = vmatprep.subr.mxu0 0.0
        %588 = vmatpush1.xpose.msra.mxu0 %v585
        %589 = vmatprep.subr.mxu0 0.0
        %590 = vmatpush1.xpose.msra.mxu0 0.0
        %591 = vmatprep.subr.mxu0 0.0
        %592 = vmatpush1.xpose.msra.mxu0 0.0
        %593 = vmatprep.subr.mxu0 0.0
        %594 = vmatpush1.xpose.msra.mxu0 0.0
        %595 = vmatprep.subr.mxu0 0.0
        %596 = vmatpush1.xpose.msra.mxu0 0.0
        %597 = vmatprep.subr.mxu0 0.0
        %598 = vmatpush1.xpose.msra.mxu0 0.0
        %599 = vmatprep.subr.mxu0 0.0
        %600 = vmatpush1.xpose.msra.mxu0 0.0
        %601 = vmatprep.subr.mxu0 0.0
        %602 = vmatpush1.xpose.msra.mxu0 0.0
        %603 = vmatprep.subr.mxu0 0.0
        %604 = vmatpush1.xpose.msra.mxu0 0.0
        %605 = vmatprep.subr.mxu0 0.0
        %606 = vmatpush1.xpose.msra.mxu0 0.0
        %607 = vmatprep.subr.mxu0 0.0
        %608 = vmatpush1.xpose.msra.mxu0 0.0
        %609 = vmatprep.subr.mxu0 0.0
        %610 = vmatpush1.xpose.msra.mxu0 0.0
        %611 = vmatprep.subr.mxu0 0.0
        %612 = vmatpush1.xpose.msra.mxu0 0.0
        %613 = vmatprep.subr.mxu0 0.0
        %614 = vmatpush1.xpose.msra.mxu0 0.0
        %615 = vmatprep.subr.mxu0 0.0
        %616 = vmatpush1.xpose.msra.mxu0 0.0
        %617 = vmatprep.subr.mxu0 0.0
        %618 = vmatpush1.xpose.msra.mxu0 0.0
        %619 = vmatprep.subr.mxu0 0.0
        %620 = vmatpush1.xpose.msra.mxu0 0.0
        %621 = vmatprep.subr.mxu0 0.0
        %622 = vmatpush1.xpose.msra.mxu0 0.0
        %623 = vmatprep.subr.mxu0 0.0
        %624 = vmatpush1.xpose.msra.mxu0 0.0
        %625 = vmatprep.subr.mxu0 0.0
        %626 = vmatpush1.xpose.msra.mxu0 0.0
        %627 = vmatprep.subr.mxu0 0.0
        %628 = vmatpush1.xpose.msra.mxu0 0.0
        %629 = vmatprep.subr.mxu0 0.0
        %630 = vmatpush1.xpose.msra.mxu0 0.0
        %631 = vmatprep.subr.mxu0 0.0
        %632 = vmatpush1.xpose.msra.mxu0 0.0
        %633 = vmatprep.subr.mxu0 0.0
        %634 = vmatpush1.xpose.msra.mxu0 0.0
        %635 = vmatprep.subr.mxu0 0.0
        %636 = vmatpush1.xpose.msra.mxu0 0.0
        %637 = vmatprep.subr.mxu0 0.0
        %638 = vmatpush1.xpose.msra.mxu0 0.0
        %639 = vmatprep.subr.mxu0 0.0
        %640 = vmatpush1.xpose.msra.mxu0 0.0
        %641 = vmatprep.subr.mxu0 0.0
        %642 = vmatpush1.xpose.msra.mxu0 0.0
        %643 = vmatprep.subr.mxu0 0.0
        %644 = vmatpush1.xpose.msra.mxu0 0.0
        %645 = vmatprep.subr.mxu0 0.0
        %646 = vmatpush1.xpose.msra.mxu0 0.0
        %647 = vmatprep.subr.mxu0 0.0
        %648 = vmatpush1.xpose.msra.mxu0 0.0
        %649 = vmatprep.subr.mxu0 0.0
        %650 = vmatpush1.xpose.msra.mxu0 0.0
        %651 = vmatprep.mubr.f32.mxu0 0.0
        %652 = vmatmul.mubr.f32.gmra.mrb[0].mxu0 %v582
        %v653 = vpop.f32.mrb[0].mxu0
        %v654 = vadd.f32 0.0, %v653
        %v655 = vpop.f32.mrb[0].mxu0
        %656 = vdwg.mxu0
        %v658 = vsel %vm580, %v579, 0
        %v661 = vsel %vm580, %v492, 0
        %663 = vmatprep.subr.mxu0 0.0
        %664 = vmatpush1.xpose.msra.mxu0 %v661
        %665 = vmatprep.subr.mxu0 0.0
        %666 = vmatpush1.xpose.msra.mxu0 0.0
        %667 = vmatprep.subr.mxu0 0.0
        %668 = vmatpush1.xpose.msra.mxu0 0.0
        %669 = vmatprep.subr.mxu0 0.0
        %670 = vmatpush1.xpose.msra.mxu0 0.0
        %671 = vmatprep.subr.mxu0 0.0
        %672 = vmatpush1.xpose.msra.mxu0 0.0
        %673 = vmatprep.subr.mxu0 0.0
        %674 = vmatpush1.xpose.msra.mxu0 0.0
        %675 = vmatprep.subr.mxu0 0.0
        %676 = vmatpush1.xpose.msra.mxu0 0.0
        %677 = vmatprep.subr.mxu0 0.0
        %678 = vmatpush1.xpose.msra.mxu0 0.0
        %679 = vmatprep.subr.mxu0 0.0
        %680 = vmatpush1.xpose.msra.mxu0 0.0
        %681 = vmatprep.subr.mxu0 0.0
        %682 = vmatpush1.xpose.msra.mxu0 0.0
        %683 = vmatprep.subr.mxu0 0.0
        %684 = vmatpush1.xpose.msra.mxu0 0.0
        %685 = vmatprep.subr.mxu0 0.0
        %686 = vmatpush1.xpose.msra.mxu0 0.0
        %687 = vmatprep.subr.mxu0 0.0
        %688 = vmatpush1.xpose.msra.mxu0 0.0
        %689 = vmatprep.subr.mxu0 0.0
        %690 = vmatpush1.xpose.msra.mxu0 0.0
        %691 = vmatprep.subr.mxu0 0.0
        %692 = vmatpush1.xpose.msra.mxu0 0.0
        %693 = vmatprep.subr.mxu0 0.0
        %694 = vmatpush1.xpose.msra.mxu0 0.0
        %695 = vmatprep.subr.mxu0 0.0
        %696 = vmatpush1.xpose.msra.mxu0 0.0
        %697 = vmatprep.subr.mxu0 0.0
        %698 = vmatpush1.xpose.msra.mxu0 0.0
        %699 = vmatprep.subr.mxu0 0.0
        %700 = vmatpush1.xpose.msra.mxu0 0.0
        %701 = vmatprep.subr.mxu0 0.0
        %702 = vmatpush1.xpose.msra.mxu0 0.0
        %703 = vmatprep.subr.mxu0 0.0
        %704 = vmatpush1.xpose.msra.mxu0 0.0
        %705 = vmatprep.subr.mxu0 0.0
        %706 = vmatpush1.xpose.msra.mxu0 0.0
        %707 = vmatprep.subr.mxu0 0.0
        %708 = vmatpush1.xpose.msra.mxu0 0.0
        %709 = vmatprep.subr.mxu0 0.0
        %710 = vmatpush1.xpose.msra.mxu0 0.0
        %711 = vmatprep.subr.mxu0 0.0
        %712 = vmatpush1.xpose.msra.mxu0 0.0
        %713 = vmatprep.subr.mxu0 0.0
        %714 = vmatpush1.xpose.msra.mxu0 0.0
        %715 = vmatprep.subr.mxu0 0.0
        %716 = vmatpush1.xpose.msra.mxu0 0.0
        %717 = vmatprep.subr.mxu0 0.0
        %718 = vmatpush1.xpose.msra.mxu0 0.0
        %719 = vmatprep.subr.mxu0 0.0
        %720 = vmatpush1.xpose.msra.mxu0 0.0
        %721 = vmatprep.subr.mxu0 0.0
        %722 = vmatpush1.xpose.msra.mxu0 0.0
        %723 = vmatprep.subr.mxu0 0.0
        %724 = vmatpush1.xpose.msra.mxu0 0.0
        %725 = vmatprep.subr.mxu0 0.0
        %726 = vmatpush1.xpose.msra.mxu0 0.0
        %727 = vmatprep.mubr.f32.mxu0 0.0
        %728 = vmatmul.mubr.f32.gmra.mrb[0].mxu0 %v658
        %v729 = vpop.f32.mrb[0].mxu0
        %v730 = vadd.f32 0.0, %v729
        %v731 = vpop.f32.mrb[0].mxu0
        %732 = vdwg.mxu0
        %vm733 = vcmask 64512
        %v734 = vsel %vm733, %v654, -inf
        %735 = vmax.xlane.f32.xlu0 %v734
        %v736 = vpop.xlane.xlu0 %735
        %v737 = vsel %vm733, %v730, -inf
        %738 = vmax.xlane.f32.xlu0 %v737
        %v739 = vpop.xlane.xlu0 %738
        %v740 = vsub.f32 %v654, %v736
        %v741 = vsub.f32 %v730, %v739
        %v742 = vmul.f32 %v740, 1.442695
        %v743 = vpow.pop %v742
        %v744 = vmul.f32 %v741, 1.442695
        %v745 = vpow.pop %v744
        %v746 = vsel %vm733, %v743, 0.0
        %747 = vadd.xlane.f32.xlu0 %v746
        %v748 = vpop.xlane.xlu0 %747
        %v749 = vsel %vm733, %v745, 0.0
        %750 = vadd.xlane.f32.xlu0 %v749
        %v751 = vpop.xlane.xlu0 %750
        %v752 = vrcp.pop %v748
        %v753 = vrcp.pop %v751
        %v754 = vmul.f32 %v743, %v752
        %v755 = vmul.f32 %v745, %v753
        %v757 = vsel %vm733, %v754, 0
        %759 = vmatprep.subr.mxu0 0.0
        %760 = vmatpush1.msra.mxu0 %v568
        %761 = vmatprep.subr.mxu0 0.0
        %762 = vmatpush1.msra.mxu0 0.0
        %763 = vmatprep.subr.mxu0 0.0
        %764 = vmatpush1.msra.mxu0 0.0
        %765 = vmatprep.subr.mxu0 0.0
        %766 = vmatpush1.msra.mxu0 0.0
        %767 = vmatprep.subr.mxu0 0.0
        %768 = vmatpush1.msra.mxu0 0.0
        %769 = vmatprep.subr.mxu0 0.0
        %770 = vmatpush1.msra.mxu0 0.0
        %771 = vmatprep.subr.mxu0 0.0
        %772 = vmatpush1.msra.mxu0 0.0
        %773 = vmatprep.subr.mxu0 0.0
        %774 = vmatpush1.msra.mxu0 0.0
        %775 = vmatprep.subr.mxu0 0.0
        %776 = vmatpush1.msra.mxu0 0.0
        %777 = vmatprep.subr.mxu0 0.0
        %778 = vmatpush1.msra.mxu0 0.0
        %779 = vmatprep.subr.mxu0 0.0
        %780 = vmatpush1.msra.mxu0 0.0
        %781 = vmatprep.subr.mxu0 0.0
        %782 = vmatpush1.msra.mxu0 0.0
        %783 = vmatprep.subr.mxu0 0.0
        %784 = vmatpush1.msra.mxu0 0.0
        %785 = vmatprep.subr.mxu0 0.0
        %786 = vmatpush1.msra.mxu0 0.0
        %787 = vmatprep.subr.mxu0 0.0
        %788 = vmatpush1.msra.mxu0 0.0
        %789 = vmatprep.subr.mxu0 0.0
        %790 = vmatpush1.msra.mxu0 0.0
        %791 = vmatprep.subr.mxu0 0.0
        %792 = vmatpush1.msra.mxu0 0.0
        %793 = vmatprep.subr.mxu0 0.0
        %794 = vmatpush1.msra.mxu0 0.0
        %795 = vmatprep.subr.mxu0 0.0
        %796 = vmatpush1.msra.mxu0 0.0
        %797 = vmatprep.subr.mxu0 0.0
        %798 = vmatpush1.msra.mxu0 0.0
        %799 = vmatprep.subr.mxu0 0.0
        %800 = vmatpush1.msra.mxu0 0.0
        %801 = vmatprep.subr.mxu0 0.0
        %802 = vmatpush1.msra.mxu0 0.0
        %803 = vmatprep.subr.mxu0 0.0
        %804 = vmatpush1.msra.mxu0 0.0
        %805 = vmatprep.subr.mxu0 0.0
        %806 = vmatpush1.msra.mxu0 0.0
        %807 = vmatprep.subr.mxu0 0.0
        %808 = vmatpush1.msra.mxu0 0.0
        %809 = vmatprep.subr.mxu0 0.0
        %810 = vmatpush1.msra.mxu0 0.0
        %811 = vmatprep.subr.mxu0 0.0
        %812 = vmatpush1.msra.mxu0 0.0
        %813 = vmatprep.subr.mxu0 0.0
        %814 = vmatpush1.msra.mxu0 0.0
        %815 = vmatprep.subr.mxu0 0.0
        %816 = vmatpush1.msra.mxu0 0.0
        %817 = vmatprep.subr.mxu0 0.0
        %818 = vmatpush1.msra.mxu0 0.0
        %819 = vmatprep.subr.mxu0 0.0
        %820 = vmatpush1.msra.mxu0 0.0
        %821 = vmatprep.subr.mxu0 0.0
        %822 = vmatpush1.msra.mxu0 0.0
        %823 = vmatprep.mubr.f32.mxu0 0.0
        %824 = vmatmul.mubr.f32.gmra.mrb[0].mxu0 %v757
        %v825 = vpop.f32.mrb[0].mxu0
        %v826 = vadd.f32 0.0, %v825
        %v827 = vpop.f32.mrb[0].mxu0
        %828 = vdwg.mxu0
        %v830 = vsel %vm733, %v755, 0
        %832 = vmatprep.subr.mxu0 0.0
        %833 = vmatpush1.msra.mxu0 %v573
        %834 = vmatprep.subr.mxu0 0.0
        %835 = vmatpush1.msra.mxu0 0.0
        %836 = vmatprep.subr.mxu0 0.0
        %837 = vmatpush1.msra.mxu0 0.0
        %838 = vmatprep.subr.mxu0 0.0
        %839 = vmatpush1.msra.mxu0 0.0
        %840 = vmatprep.subr.mxu0 0.0
        %841 = vmatpush1.msra.mxu0 0.0
        %842 = vmatprep.subr.mxu0 0.0
        %843 = vmatpush1.msra.mxu0 0.0
        %844 = vmatprep.subr.mxu0 0.0
        %845 = vmatpush1.msra.mxu0 0.0
        %846 = vmatprep.subr.mxu0 0.0
        %847 = vmatpush1.msra.mxu0 0.0
        %848 = vmatprep.subr.mxu0 0.0
        %849 = vmatpush1.msra.mxu0 0.0
        %850 = vmatprep.subr.mxu0 0.0
        %851 = vmatpush1.msra.mxu0 0.0
        %852 = vmatprep.subr.mxu0 0.0
        %853 = vmatpush1.msra.mxu0 0.0
        %854 = vmatprep.subr.mxu0 0.0
        %855 = vmatpush1.msra.mxu0 0.0
        %856 = vmatprep.subr.mxu0 0.0
        %857 = vmatpush1.msra.mxu0 0.0
        %858 = vmatprep.subr.mxu0 0.0
        %859 = vmatpush1.msra.mxu0 0.0
        %860 = vmatprep.subr.mxu0 0.0
        %861 = vmatpush1.msra.mxu0 0.0
        %862 = vmatprep.subr.mxu0 0.0
        %863 = vmatpush1.msra.mxu0 0.0
        %864 = vmatprep.subr.mxu0 0.0
        %865 = vmatpush1.msra.mxu0 0.0
        %866 = vmatprep.subr.mxu0 0.0
        %867 = vmatpush1.msra.mxu0 0.0
        %868 = vmatprep.subr.mxu0 0.0
        %869 = vmatpush1.msra.mxu0 0.0
        %870 = vmatprep.subr.mxu0 0.0
        %871 = vmatpush1.msra.mxu0 0.0
        %872 = vmatprep.subr.mxu0 0.0
        %873 = vmatpush1.msra.mxu0 0.0
        %874 = vmatprep.subr.mxu0 0.0
        %875 = vmatpush1.msra.mxu0 0.0
        %876 = vmatprep.subr.mxu0 0.0
        %877 = vmatpush1.msra.mxu0 0.0
        %878 = vmatprep.subr.mxu0 0.0
        %879 = vmatpush1.msra.mxu0 0.0
        %880 = vmatprep.subr.mxu0 0.0
        %881 = vmatpush1.msra.mxu0 0.0
        %882 = vmatprep.subr.mxu0 0.0
        %883 = vmatpush1.msra.mxu0 0.0
        %884 = vmatprep.subr.mxu0 0.0
        %885 = vmatpush1.msra.mxu0 0.0
        %886 = vmatprep.subr.mxu0 0.0
        %887 = vmatpush1.msra.mxu0 0.0
        %888 = vmatprep.subr.mxu0 0.0
        %889 = vmatpush1.msra.mxu0 0.0
        %890 = vmatprep.subr.mxu0 0.0
        %891 = vmatpush1.msra.mxu0 0.0
        %892 = vmatprep.subr.mxu0 0.0
        %893 = vmatpush1.msra.mxu0 0.0
        %894 = vmatprep.subr.mxu0 0.0
        %895 = vmatpush1.msra.mxu0 0.0
        %896 = vmatprep.mubr.f32.mxu0 0.0
        %897 = vmatmul.mubr.f32.gmra.mrb[0].mxu0 %v830
        %v898 = vpop.f32.mrb[0].mxu0
        %v899 = vadd.f32 0.0, %v898
        %v900 = vpop.f32.mrb[0].mxu0
        %901 = vdwg.mxu0
        %v903 = vsel %vm580, %v826, 0
        %v906 = vsel %vm580, %v899, 0
        %908 = vmatprep.subr.mxu0 0.0
        %909 = vmatpush1.msra.mxu0 %v576
        %910 = vmatprep.subr.mxu0 0.0
        %911 = vmatpush1.msra.mxu0 %v577
        %912 = vmatprep.subr.mxu0 0.0
        %913 = vmatpush1.msra.mxu0 0.0
        %914 = vmatprep.subr.mxu0 0.0
        %915 = vmatpush1.msra.mxu0 0.0
        %916 = vmatprep.subr.mxu0 0.0
        %917 = vmatpush1.msra.mxu0 0.0
        %918 = vmatprep.subr.mxu0 0.0
        %919 = vmatpush1.msra.mxu0 0.0
        %920 = vmatprep.subr.mxu0 0.0
        %921 = vmatpush1.msra.mxu0 0.0
        %922 = vmatprep.subr.mxu0 0.0
        %923 = vmatpush1.msra.mxu0 0.0
        %924 = vmatprep.subr.mxu0 0.0
        %925 = vmatpush1.msra.mxu0 0.0
        %926 = vmatprep.subr.mxu0 0.0
        %927 = vmatpush1.msra.mxu0 0.0
        %928 = vmatprep.subr.mxu0 0.0
        %929 = vmatpush1.msra.mxu0 0.0
        %930 = vmatprep.subr.mxu0 0.0
        %931 = vmatpush1.msra.mxu0 0.0
        %932 = vmatprep.subr.mxu0 0.0
        %933 = vmatpush1.msra.mxu0 0.0
        %934 = vmatprep.subr.mxu0 0.0
        %935 = vmatpush1.msra.mxu0 0.0
        %936 = vmatprep.subr.mxu0 0.0
        %937 = vmatpush1.msra.mxu0 0.0
        %938 = vmatprep.subr.mxu0 0.0
        %939 = vmatpush1.msra.mxu0 0.0
        %940 = vmatprep.subr.mxu0 0.0
        %941 = vmatpush1.msra.mxu0 0.0
        %942 = vmatprep.subr.mxu0 0.0
        %943 = vmatpush1.msra.mxu0 0.0
        %944 = vmatprep.subr.mxu0 0.0
        %945 = vmatpush1.msra.mxu0 0.0
        %946 = vmatprep.subr.mxu0 0.0
        %947 = vmatpush1.msra.mxu0 0.0
        %948 = vmatprep.subr.mxu0 0.0
        %949 = vmatpush1.msra.mxu0 0.0
        %950 = vmatprep.subr.mxu0 0.0
        %951 = vmatpush1.msra.mxu0 0.0
        %952 = vmatprep.subr.mxu0 0.0
        %953 = vmatpush1.msra.mxu0 0.0
        %954 = vmatprep.subr.mxu0 0.0
        %955 = vmatpush1.msra.mxu0 0.0
        %956 = vmatprep.subr.mxu0 0.0
        %957 = vmatpush1.msra.mxu0 0.0
        %958 = vmatprep.subr.mxu0 0.0
        %959 = vmatpush1.msra.mxu0 0.0
        %960 = vmatprep.subr.mxu0 0.0
        %961 = vmatpush1.msra.mxu0 0.0
        %962 = vmatprep.subr.mxu0 0.0
        %963 = vmatpush1.msra.mxu0 0.0
        %964 = vmatprep.subr.mxu0 0.0
        %965 = vmatpush1.msra.mxu0 0.0
        %966 = vmatprep.subr.mxu0 0.0
        %967 = vmatpush1.msra.mxu0 0.0
        %968 = vmatprep.subr.mxu0 0.0
        %969 = vmatpush1.msra.mxu0 0.0
        %970 = vmatprep.subr.mxu0 0.0
        %971 = vmatpush1.msra.mxu0 0.0
        %972 = vmatprep.mubr.f32.mxu0 0.0
        %973 = vmatmul.mubr.f32.gmra.mrb[0].mxu0 %v903
        %v974 = vpop.f32.mrb[0].mxu0
        %v975 = vadd.f32 0.0, %v974
        %v976 = vpop.f32.mrb[0].mxu0
        %977 = vmatprep.mubr.f32.mxu0 0.0
        %978 = vmatmul.mubr.f32.gmra.mrb[0].mxu0 %v906
        %v979 = vpop.f32.mrb[0].mxu0
        %v980 = vadd.f32 0.0, %v979
        %v981 = vpop.f32.mrb[0].mxu0
        %982 = vdwg.mxu0
        %v983 = vld [vmem:[#allocation2] sm:$0xff]
        %v984 = vld [vmem:[#allocation2 + $0x8] sm:$0xff]
        %v985 = vadd.f32 %v983, %v975
        %v986 = vadd.f32 %v984, %v980
        %987 = vst.msk [vmem:[#allocation2] sm:$0xff] %vm332, %v985
        %988 = vst.msk [vmem:[#allocation2 + $0x8] sm:$0xff] %vm332, %v986
        %p989 = scmp.eq.s32.totalorder %s22, 1
        // Predicated region
        $region45: #{tpu_custom_call.1} parent=39 // pred_check
          %p990 = pneg %p989
        $region46: #{tpu_custom_call.1} parent=39 // pred_check_branch
          %992 = sbr.rel (%p990) target = $region48
        $region47: #{tpu_custom_call.1} parent=39 // pred_region
          %v993 = vld [vmem:[#allocation2] sm:$0xff]
          %v994 = vld [vmem:[#allocation2 + $0x8] sm:$0xff]
          %995 = vst.msk [vmem:[#allocation3] sm:$0xff] %vm332, %v993
          %996 = vst.msk [vmem:[#allocation3 + $0x8] sm:$0xff] %vm332, %v994
        $region48: #{tpu_custom_call.1} parent=39 // pred_fallthru
          _
        // Predicated region
        $region49: #{tpu_custom_call.1} parent=39 // pred_check
          %p997 = pneg %p177
        $region50: #{tpu_custom_call.1} parent=39 // pred_check_branch
          %999 = sbr.rel (%p997) target = $region52
        $region51: #{tpu_custom_call.1} parent=39 // pred_region
          %s1000 = smul.u32 2, %s21
          %s1002 = ssub.s32 256, 256
          %1003 = vsyncadd [#allocation4], %s1002
          %s1004 = smul.addr %s1000, 128
          %s1005 = scalar_lea.hbm %s5, %s1004
          %s1006 = sshll.u32 [#allocation3], 4
          %s1007 = int_to_ptr.vmem [resolvable:$true] %s1006
          %1012 = dma.vmem_to_hbm [thread:$0]  %s1007, 256, %s1005, [#allocation4], 128, 128, 8
        $region52: #{tpu_custom_call.1} parent=39 // pred_fallthru
          _
        // Predicated region
        $region53: #{tpu_custom_call.1} parent=39 // pred_check
          %p1013 = pneg %p177
        $region54: #{tpu_custom_call.1} parent=39 // pred_check_branch
          %1015 = sbr.rel (%p1013) target = $region56
        $region55: #{tpu_custom_call.1} parent=39 // pred_region
          %1016 = dma.done [#allocation4], 256
        $region56: #{tpu_custom_call.1} parent=39 // pred_fallthru
          _
      $region40: #{tpu_custom_call.1} parent=5 // pred_fallthru
        _
      %p1017 = scmp.le.s32.totalorder 2, %s12
      // Predicated region
      $region57: #{tpu_custom_call.1} parent=5 // pred_check
        %p1018 = pneg %p1017
      $region58: #{tpu_custom_call.1} parent=5 // pred_check_branch
        %1020 = sbr.rel (%p1018) target = $region60
      $region59: #{tpu_custom_call.1} parent=5 // pred_region
        %s1021 = ssub.s32 %s12, 2
      $region60: #{tpu_custom_call.1} parent=5 // pred_fallthru
        _
    $region6: #{tpu_custom_call.1} parent=1 // loop_footer
      %s16 = sadd.s32 1, %s12
    $region7: #{tpu_custom_call.1} parent=1 // loop_footer_branch
      %11 = sbr.rel target = $region3
    $region8: #{tpu_custom_call.1} parent=1 // loop_exit
      _
    %1022 = vsyncpa [#allocation4], 1
    %s1023 = scalar_lea.sflag [#allocation4], 1
    %1024 = vsyncpa %s1023, 1

</llo_original>
